<compile_context>
chip_gen: v5e
topology: v5e:2x2
jax: 0.10.0
libtpu: 0.0.40
codegen_flags: <defaults>
</compile_context>

<pallas_src>
import jax
import jax.numpy as jnp
from jax.experimental import pallas as pl
from jax.experimental.pallas import tpu as pltpu

IN_FEATURES = 784
HIDDEN = 128
OUT_FEATURES = 10


def secureml_kernel(x_ref, w1_ref, b1_ref, w2_ref, b2_ref, w3_ref, b3_ref, o_ref):
    # layer 1: (TB, 784) @ (784, 128) + (1, 128), ReLU.  x is f32 in VMEM; cast
    # to bf16 right before the MXU dot, accumulate in f32.
    x = x_ref[...].astype(w1_ref.dtype)
    h1 = jnp.dot(x, w1_ref[...], preferred_element_type=jnp.float32)
    h1 = jnp.maximum(h1 + b1_ref[...], 0.0)
    # layer 2: (TB, 128) @ (128, 128) + (1, 128), ReLU
    h2 = jnp.dot(h1.astype(w2_ref.dtype), w2_ref[...],
                 preferred_element_type=jnp.float32)
    h2 = jnp.maximum(h2 + b2_ref[...], 0.0)
    # layer 3: (TB, 128) @ (128, 10) + (1, 10)
    out = jnp.dot(h2.astype(w3_ref.dtype), w3_ref[...],
                  preferred_element_type=jnp.float32)
    o_ref[...] = (out + b3_ref[...]).astype(o_ref.dtype)


def prepare_params(params, compute_dtype=jnp.bfloat16):
    """One-time cast/reshape of weights & biases (hoisted out of forward)."""
    w1, b1, w2, b2, w3, b3 = params  # weights stored (in, out); biases (1, out)
    return (
        w1.astype(compute_dtype),
        b1.astype(jnp.float32).reshape(1, HIDDEN),
        w2.astype(compute_dtype),
        b2.astype(jnp.float32).reshape(1, HIDDEN),
        w3.astype(compute_dtype),
        b3.astype(jnp.float32).reshape(1, OUT_FEATURES),
    )


def _round_up(n, m):
    return ((n + m - 1) // m) * m


def secureml_forward(x, prepared_params, *, block_b=1024):
    """Forward pass matching SecureML.forward: x.view(-1, 784) -> (B, 10)."""
    w1, b1, w2, b2, w3, b3 = prepared_params
    x2d = x.reshape(-1, IN_FEATURES)
    B = x2d.shape[0]

    # Batch tile: multiple of 16 sublanes (bf16 packing); for large batches use
    # big tiles (amortize per-step overhead) but keep >= 2 tiles so the
    # "parallel" grid axis can shard across v7x's two TensorCores.
    if B <= 32:
        tb = _round_up(max(B, 1), 16)
    else:
        tb = min(block_b, _round_up(pl.cdiv(B, 2), 16))
    n_tiles = pl.cdiv(B, tb)

    # --- cost hint for the XLA scheduler ----------------------------------
    weight_elems = (IN_FEATURES * HIDDEN + HIDDEN * HIDDEN + HIDDEN * OUT_FEATURES)
    cost = pl.CostEstimate(
        flops=2 * B * weight_elems,
        bytes_accessed=B * (IN_FEATURES * 4 + OUT_FEATURES * 4) + weight_elems * 2,
        transcendentals=0,
    )

    out = pl.pallas_call(
        secureml_kernel,
        out_shape=jax.ShapeDtypeStruct((B, OUT_FEATURES), jnp.float32),
        grid=(n_tiles,),
        in_specs=[
            pl.BlockSpec((tb, IN_FEATURES), lambda i: (i, 0)),        # x tile (pipelined)
            pl.BlockSpec((IN_FEATURES, HIDDEN), lambda i: (0, 0)),    # W1 (resident)
            pl.BlockSpec((1, HIDDEN), lambda i: (0, 0)),              # b1
            pl.BlockSpec((HIDDEN, HIDDEN), lambda i: (0, 0)),         # W2
            pl.BlockSpec((1, HIDDEN), lambda i: (0, 0)),              # b2
            pl.BlockSpec((HIDDEN, OUT_FEATURES), lambda i: (0, 0)),   # W3
            pl.BlockSpec((1, OUT_FEATURES), lambda i: (0, 0)),        # b3
        ],
        out_specs=pl.BlockSpec((tb, OUT_FEATURES), lambda i: (i, 0)),
        compiler_params=pltpu.CompilerParams(
            dimension_semantics=("parallel",),   # megacore sharding on v7x
            vmem_limit_bytes=32 << 20,           # fits v7x's 64 MiB physical VMEM
        ),
        cost_estimate=cost,
    )(x2d, w1, b1, w2, b2, w3, b3)

    return out


def init_params(key):
    """Deterministic parameter init (shapes match the nn.Linear layers)."""
    ks = jax.random.split(key, 6)

    def linear(kw, kb, fan_in, fan_out):
        # PyTorch-style uniform(-1/sqrt(fan_in), 1/sqrt(fan_in)); stored (in, out).
        bound = 1.0 / jnp.sqrt(fan_in)
        w = jax.random.uniform(kw, (fan_in, fan_out), jnp.float32, -bound, bound)
        b = jax.random.uniform(kb, (1, fan_out), jnp.float32, -bound, bound)
        return w, b

    w1, b1 = linear(ks[0], ks[1], 784, 128)
    w2, b2 = linear(ks[2], ks[3], 128, 128)
    w3, b3 = linear(ks[4], ks[5], 128, 10)
    return (w1, b1, w2, b2, w3, b3)


def secureml_reference(x, params):
    """Pure-JAX f32 reference of the PyTorch forward pass."""
    w1, b1, w2, b2, w3, b3 = params
    h = x.reshape(-1, 784).astype(jnp.float32)
    h = jnp.maximum(h @ w1 + b1, 0.0)
    h = jnp.maximum(h @ w2 + b2, 0.0)
    return h @ w3 + b3


if __name__ == "__main__":
    key = jax.random.PRNGKey(0)
    k_param, k_x = jax.random.split(key)

    params = init_params(k_param)
    prepared = prepare_params(params)   # cast/reshape weights once, outside forward

    # MNIST-like input: batch=2, 1x28x28 images -> view(-1, 784)
    x = jax.random.normal(k_x, (2, 1, 28, 28), dtype=jnp.float32)

    out = secureml_forward(x, prepared)
    out = jax.block_until_ready(out)

    ref = secureml_reference(x, params)
    assert out.shape == (2, 10)
    # bf16 matmul operands with f32 accumulation -> loosened tolerance.
    assert jnp.allclose(out, ref, atol=3e-2, rtol=3e-2)

    print("KERNEL_OK")
</pallas_src>

<mosaic_0001>
module attributes {stable_mosaic.version = 11 : i64} {
  func.func @secureml_kernel(%arg0: i32, %arg1: memref<16x784xf32, #tpu.memory_space<vmem>>, %arg2: memref<784x128xbf16, #tpu.memory_space<vmem>>, %arg3: memref<1x128xf32, #tpu.memory_space<vmem>>, %arg4: memref<128x128xbf16, #tpu.memory_space<vmem>>, %arg5: memref<1x128xf32, #tpu.memory_space<vmem>>, %arg6: memref<128x10xbf16, #tpu.memory_space<vmem>>, %arg7: memref<1x10xf32, #tpu.memory_space<vmem>>, %arg8: memref<16x10xf32, #tpu.memory_space<vmem>>) attributes {dimension_semantics = [#tpu.dimension_semantics<parallel>], iteration_bounds = array<i64: 1>, scalar_prefetch = 0 : i64, scratch_operands = 0 : i64, tpu.core_type = #tpu.core_type<tc>, window_params = [{transform_indices = @transform_0, window_bounds = array<i64: 16, 784>}, {pipeline_mode = #tpu.pipeline_mode<synchronous>, transform_indices = @transform_1, window_bounds = array<i64: 784, 128>}, {pipeline_mode = #tpu.pipeline_mode<synchronous>, transform_indices = @transform_2, window_bounds = array<i64: 1, 128>}, {pipeline_mode = #tpu.pipeline_mode<synchronous>, transform_indices = @transform_3, window_bounds = array<i64: 128, 128>}, {pipeline_mode = #tpu.pipeline_mode<synchronous>, transform_indices = @transform_4, window_bounds = array<i64: 1, 128>}, {pipeline_mode = #tpu.pipeline_mode<synchronous>, transform_indices = @transform_5, window_bounds = array<i64: 128, 10>}, {pipeline_mode = #tpu.pipeline_mode<synchronous>, transform_indices = @transform_6, window_bounds = array<i64: 1, 10>}, {transform_indices = @transform_7, window_bounds = array<i64: 16, 10>}]} {
    %c0 = arith.constant 0 : index
    %c0_0 = arith.constant 0 : index
    %0 = vector.load %arg1[%c0, %c0_0] : memref<16x784xf32, #tpu.memory_space<vmem>>, vector<16x784xf32>
    %1 = arith.truncf %0 : vector<16x784xf32> to vector<16x784xbf16>
    %c0_1 = arith.constant 0 : index
    %c0_2 = arith.constant 0 : index
    %2 = vector.load %arg2[%c0_1, %c0_2] : memref<784x128xbf16, #tpu.memory_space<vmem>>, vector<784x128xbf16>
    %cst = arith.constant dense<0.000000e+00> : vector<16x128xf32>
    %3 = tpu.matmul %1, %2, %cst {dimension_numbers = #tpu.dot_dimension_numbers<[1], [0], [0], [1], [0, 0, 1, 1], [], []>} : vector<16x784xbf16>, vector<784x128xbf16>, vector<16x128xf32> -> vector<16x128xf32>
    %c0_3 = arith.constant 0 : index
    %c0_4 = arith.constant 0 : index
    %4 = vector.load %arg3[%c0_3, %c0_4] : memref<1x128xf32, #tpu.memory_space<vmem>>, vector<1x128xf32>
    %5 = vector.broadcast %4 : vector<1x128xf32> to vector<16x128xf32>
    %6 = arith.addf %3, %5 : vector<16x128xf32>
    %cst_5 = arith.constant 0.000000e+00 : f32
    %7 = vector.broadcast %cst_5 : f32 to vector<16x128xf32>
    %8 = arith.maximumf %6, %7 : vector<16x128xf32>
    %9 = arith.truncf %8 : vector<16x128xf32> to vector<16x128xbf16>
    %c0_6 = arith.constant 0 : index
    %c0_7 = arith.constant 0 : index
    %10 = vector.load %arg4[%c0_6, %c0_7] : memref<128x128xbf16, #tpu.memory_space<vmem>>, vector<128x128xbf16>
    %cst_8 = arith.constant dense<0.000000e+00> : vector<16x128xf32>
    %11 = tpu.matmul %9, %10, %cst_8 {dimension_numbers = #tpu.dot_dimension_numbers<[1], [0], [0], [1], [0, 0, 1, 1], [], []>} : vector<16x128xbf16>, vector<128x128xbf16>, vector<16x128xf32> -> vector<16x128xf32>
    %c0_9 = arith.constant 0 : index
    %c0_10 = arith.constant 0 : index
    %12 = vector.load %arg5[%c0_9, %c0_10] : memref<1x128xf32, #tpu.memory_space<vmem>>, vector<1x128xf32>
    %13 = vector.broadcast %12 : vector<1x128xf32> to vector<16x128xf32>
    %14 = arith.addf %11, %13 : vector<16x128xf32>
    %cst_11 = arith.constant 0.000000e+00 : f32
    %15 = vector.broadcast %cst_11 : f32 to vector<16x128xf32>
    %16 = arith.maximumf %14, %15 : vector<16x128xf32>
    %17 = arith.truncf %16 : vector<16x128xf32> to vector<16x128xbf16>
    %c0_12 = arith.constant 0 : index
    %c0_13 = arith.constant 0 : index
    %18 = vector.load %arg6[%c0_12, %c0_13] : memref<128x10xbf16, #tpu.memory_space<vmem>>, vector<128x10xbf16>
    %cst_14 = arith.constant dense<0.000000e+00> : vector<16x10xf32>
    %19 = tpu.matmul %17, %18, %cst_14 {dimension_numbers = #tpu.dot_dimension_numbers<[1], [0], [0], [1], [0, 0, 1, 1], [], []>} : vector<16x128xbf16>, vector<128x10xbf16>, vector<16x10xf32> -> vector<16x10xf32>
    %c0_15 = arith.constant 0 : index
    %c0_16 = arith.constant 0 : index
    %20 = vector.load %arg7[%c0_15, %c0_16] : memref<1x10xf32, #tpu.memory_space<vmem>>, vector<1x10xf32>
    %21 = vector.broadcast %20 : vector<1x10xf32> to vector<16x10xf32>
    %22 = arith.addf %19, %21 : vector<16x10xf32>
    %c0_17 = arith.constant 0 : index
    %c0_18 = arith.constant 0 : index
    %23 = vector.load %arg8[%c0_17, %c0_18] : memref<16x10xf32, #tpu.memory_space<vmem>>, vector<16x10xf32>
    tpu.vector_store %arg8[%c0_17, %c0_18], %22 {strides = array<i32>} : memref<16x10xf32, #tpu.memory_space<vmem>>, vector<16x10xf32>,
    return
  }
  func.func @transform_0(%arg0: i32) -> (i32, i32) {
    %c0_i32 = arith.constant 0 : i32
    %c0_i32_0 = arith.constant 0 : i32
    return %arg0, %c0_i32 : i32, i32
  }
  func.func @transform_1(%arg0: i32) -> (i32, i32) {
    %c0_i32 = arith.constant 0 : i32
    %c0_i32_0 = arith.constant 0 : i32
    %c0_i32_1 = arith.constant 0 : i32
    return %c0_i32, %c0_i32_0 : i32, i32
  }
  func.func @transform_2(%arg0: i32) -> (i32, i32) {
    %c0_i32 = arith.constant 0 : i32
    %c0_i32_0 = arith.constant 0 : i32
    %c0_i32_1 = arith.constant 0 : i32
    return %c0_i32, %c0_i32_0 : i32, i32
  }
  func.func @transform_3(%arg0: i32) -> (i32, i32) {
    %c0_i32 = arith.constant 0 : i32
    %c0_i32_0 = arith.constant 0 : i32
    %c0_i32_1 = arith.constant 0 : i32
    return %c0_i32, %c0_i32_0 : i32, i32
  }
  func.func @transform_4(%arg0: i32) -> (i32, i32) {
    %c0_i32 = arith.constant 0 : i32
    %c0_i32_0 = arith.constant 0 : i32
    %c0_i32_1 = arith.constant 0 : i32
    return %c0_i32, %c0_i32_0 : i32, i32
  }
  func.func @transform_5(%arg0: i32) -> (i32, i32) {
    %c0_i32 = arith.constant 0 : i32
    %c0_i32_0 = arith.constant 0 : i32
    %c0_i32_1 = arith.constant 0 : i32
    return %c0_i32, %c0_i32_0 : i32, i32
  }
  func.func @transform_6(%arg0: i32) -> (i32, i32) {
    %c0_i32 = arith.constant 0 : i32
    %c0_i32_0 = arith.constant 0 : i32
    %c0_i32_1 = arith.constant 0 : i32
    return %c0_i32, %c0_i32_0 : i32, i32
  }
  func.func @transform_7(%arg0: i32) -> (i32, i32) {
    %c0_i32 = arith.constant 0 : i32
    %c0_i32_0 = arith.constant 0 : i32
    return %arg0, %c0_i32 : i32, i32
  }
}

</mosaic_0001>

<llo_original>
// kernel: tpu_custom_call.1
$region0: #{tpu_custom_call.1}
  #allocation0 [shape = 'u32[]', space=smem, size = 0x4, offset = 0x4, fixed_abs, tag = 'smem constant byte address 0x4 - core index']
  #allocation1 [shape = 'u32[72,128]{1,0:T(1,128)}', space=vmem, size = 0x9000, scoped, tag = 'internal scratch']
  %s0 = inlined_call_operand.hbm [shape: f32[2,784], index: 0, kind: input, shape index: {}]
  %s1 = inlined_call_operand.hbm [shape: bf16[784,128], index: 1, kind: input, shape index: {}]
  %s2 = inlined_call_operand.vmem [shape: f32[1,128], index: 2, kind: input, shape index: {}]
  %s3 = inlined_call_operand.vmem [shape: bf16[128,128], index: 3, kind: input, shape index: {}]
  %s4 = inlined_call_operand.vmem [shape: f32[1,128], index: 4, kind: input, shape index: {}]
  %s5 = inlined_call_operand.vmem [shape: bf16[128,10], index: 5, kind: input, shape index: {}]
  %s6 = inlined_call_operand.vmem [shape: f32[1,10], index: 6, kind: input, shape index: {}]
  %s7 = inlined_call_operand.hbm [shape: f32[2,10], index: 7, kind: output, shape index: {}]
  %s8 = sld [smem:[#allocation0]]
  $region46: #{tpu_custom_call.1} parent=0
    _
  %s10 = ssub.s32 1, %s8
  %s11 = scalar_select 0, %s10, %s8
  $region1: #{tpu_custom_call.1} parent=0
    #allocation2 [shape = 'u8[57344]{0}', space=vmem, size = 0xe000, scoped, tag = 'input window, operand 0, single buffered']
    #allocation3 [shape = 's32[1]{0}', space=sflag, size = 0x4, scoped, tag = 'scoped memory for tpu_custom_call.1']
    #allocation4 [shape = 's32[1]{0}', space=sflag, size = 0x4, scoped, tag = 'scoped memory for tpu_custom_call.1']
    #allocation5 [shape = 'u8[200704]{0}', space=vmem, size = 0x31000, scoped, tag = 'input window, operand 1, single buffered']
    #allocation6 [shape = 's32[1]{0}', space=sflag, size = 0x4, scoped, tag = 'scoped memory for tpu_custom_call.1']
    #allocation7 [shape = 'u8[8192]{0}', space=vmem, size = 0x2000, scoped, tag = 'output window, operand 0, single buffered']
    %12 = vsyncpa [#allocation3], 0
    %13 = vsyncpa [#allocation6], 0
    %14 = vsyncpa [#allocation4], 0
    // Predicated region
    $region2: #{tpu_custom_call.1} parent=1 // pred_check
      _
    $region3: #{tpu_custom_call.1} parent=1 // pred_check_branch
      %16 = sbr.rel (0) target = $region5
    $region4: #{tpu_custom_call.1} parent=1 // pred_region
      %18 = vsyncadd [#allocation3], 1568
      %s19 = sshll.u32 %s0, 4
      %s20 = int_to_ptr.hbm [resolvable:$true] %s19
      %s21 = sshll.u32 [#allocation2], 4
      %s22 = int_to_ptr.vmem [resolvable:$true] %s21
      %27 = dma.hbm_to_vmem [thread:$0]  %s20, 224, %s22, [#allocation3], 224, 224, 14
    $region5: #{tpu_custom_call.1} parent=1 // pred_fallthru
      _
    // Predicated region
    $region6: #{tpu_custom_call.1} parent=1 // pred_check
      _
    $region7: #{tpu_custom_call.1} parent=1 // pred_check_branch
      %29 = sbr.rel (0) target = $region9
    $region8: #{tpu_custom_call.1} parent=1 // pred_region
      %31 = vsyncadd [#allocation6], 0
      %s32 = sshll.u32 %s1, 4
      %s33 = int_to_ptr.hbm [resolvable:$true] %s32
      %s34 = sshll.u32 [#allocation5], 4
      %s35 = int_to_ptr.vmem [resolvable:$true] %s34
      %40 = dma.hbm_to_vmem [thread:$0]  %s33, 6272, %s35, [#allocation6], 64, 64, 4
    $region9: #{tpu_custom_call.1} parent=1 // pred_fallthru
      _
    // Predicated region
    $region10: #{tpu_custom_call.1} parent=1 // pred_check
      _
    $region11: #{tpu_custom_call.1} parent=1 // pred_check_branch
      %42 = sbr.rel (0) target = $region13
    $region12: #{tpu_custom_call.1} parent=1 // pred_region
      _
    $region13: #{tpu_custom_call.1} parent=1 // pred_fallthru
      _
    // Predicated region
    $region14: #{tpu_custom_call.1} parent=1 // pred_check
      _
    $region15: #{tpu_custom_call.1} parent=1 // pred_check_branch
      %44 = sbr.rel (0) target = $region17
    $region16: #{tpu_custom_call.1} parent=1 // pred_region
      _
    $region17: #{tpu_custom_call.1} parent=1 // pred_fallthru
      _
    // Predicated region
    $region18: #{tpu_custom_call.1} parent=1 // pred_check
      _
    $region19: #{tpu_custom_call.1} parent=1 // pred_check_branch
      %46 = sbr.rel (0) target = $region21
    $region20: #{tpu_custom_call.1} parent=1 // pred_region
      _
    $region21: #{tpu_custom_call.1} parent=1 // pred_fallthru
      _
    // Predicated region
    $region22: #{tpu_custom_call.1} parent=1 // pred_check
      _
    $region23: #{tpu_custom_call.1} parent=1 // pred_check_branch
      %48 = sbr.rel (0) target = $region25
    $region24: #{tpu_custom_call.1} parent=1 // pred_region
      _
    $region25: #{tpu_custom_call.1} parent=1 // pred_fallthru
      _
    // Predicated region
    $region26: #{tpu_custom_call.1} parent=1 // pred_check
      _
    $region27: #{tpu_custom_call.1} parent=1 // pred_check_branch
      %50 = sbr.rel (0) target = $region29
    $region28: #{tpu_custom_call.1} parent=1 // pred_region
      _
    $region29: #{tpu_custom_call.1} parent=1 // pred_fallthru
      _
    // Predicated region
    $region30: #{tpu_custom_call.1} parent=1 // pred_check
      _
    $region31: #{tpu_custom_call.1} parent=1 // pred_check_branch
      %52 = sbr.rel (0) target = $region33
    $region32: #{tpu_custom_call.1} parent=1 // pred_region
      %54 = dma.done [#allocation3], 1792
    $region33: #{tpu_custom_call.1} parent=1 // pred_fallthru
      _
    // Predicated region
    $region34: #{tpu_custom_call.1} parent=1 // pred_check
      _
    $region35: #{tpu_custom_call.1} parent=1 // pred_check_branch
      %56 = sbr.rel (0) target = $region37
    $region36: #{tpu_custom_call.1} parent=1 // pred_region
      %58 = dma.done [#allocation6], 6272
    $region37: #{tpu_custom_call.1} parent=1 // pred_fallthru
      _
    %v60 = vld [vmem:[#allocation2] sm:$0xff]
    %v61 = vld [vmem:[#allocation2 + $0x8] sm:$0x3f]
    %v62 = vld [vmem:[#allocation2 + $0xe] sm:$0xff]
    %v63 = vld [vmem:[#allocation2 + $0x16] sm:$0x3f]
    %v64 = vld [vmem:[#allocation2 + $0x1c] sm:$0xff]
    %v65 = vld [vmem:[#allocation2 + $0x24] sm:$0x3f]
    %v66 = vld [vmem:[#allocation2 + $0x2a] sm:$0xff]
    %v67 = vld [vmem:[#allocation2 + $0x32] sm:$0x3f]
    %v68 = vld [vmem:[#allocation2 + $0x38] sm:$0xff]
    %v69 = vld [vmem:[#allocation2 + $0x40] sm:$0x3f]
    %v70 = vld [vmem:[#allocation2 + $0x46] sm:$0xff]
    %v71 = vld [vmem:[#allocation2 + $0x4e] sm:$0x3f]
    %v72 = vld [vmem:[#allocation2 + $0x54] sm:$0xff]
    %v73 = vld [vmem:[#allocation2 + $0x5c] sm:$0x3f]
    %v74 = vld [vmem:[#allocation2 + $0x62] sm:$0xff]
    %v75 = vld [vmem:[#allocation2 + $0x6a] sm:$0x3f]
    %92 = vst [vmem:[#allocation1] ss:$4 sm:$0xff] %v60
    %s93 = scalar_lea.vmem [#allocation1], 1
    %94 = vst [vmem:[%s93] ss:$4 sm:$0xff] %v62
    %s95 = scalar_lea.vmem [#allocation1], 2
    %96 = vst [vmem:[%s95] ss:$4 sm:$0xff] %v64
    %s97 = scalar_lea.vmem [#allocation1], 3
    %98 = vst [vmem:[%s97] ss:$4 sm:$0xff] %v66
    %s99 = scalar_lea.vmem [#allocation1], 32
    %100 = vst [vmem:[%s99] ss:$4 sm:$0xff] %v61
    %s101 = scalar_lea.vmem [#allocation1], 33
    %102 = vst [vmem:[%s101] ss:$4 sm:$0xff] %v63
    %s103 = scalar_lea.vmem [#allocation1], 34
    %104 = vst [vmem:[%s103] ss:$4 sm:$0xff] %v65
    %s105 = scalar_lea.vmem [#allocation1], 35
    %106 = vst [vmem:[%s105] ss:$4 sm:$0xff] %v67
    %v107 = vld.sshfl [vmem:[#allocation1] sm:$0xff pattern:$0x73625140]
    %v108 = vld.sshfl [vmem:[#allocation1 + $0x8] sm:$0xff pattern:$0x73625140]
    %v109 = vld.sshfl [vmem:[#allocation1 + $0x10] sm:$0xff pattern:$0x73625140]
    %v110 = vld.sshfl [vmem:[#allocation1 + $0x18] sm:$0xff pattern:$0x73625140]
    %v111 = vld.sshfl [vmem:[#allocation1 + $0x20] sm:$0xff pattern:$0x73625140]
    %v112 = vld.sshfl [vmem:[#allocation1 + $0x28] sm:$0xff pattern:$0x73625140]
    %v113 = vld.sshfl [vmem:[#allocation1 + $0x30] sm:$0xff pattern:$0x73625140]
    %114 = vst [vmem:[#allocation1] ss:$4 sm:$0xff] %v68
    %115 = vst [vmem:[%s93] ss:$4 sm:$0xff] %v70
    %116 = vst [vmem:[%s95] ss:$4 sm:$0xff] %v72
    %117 = vst [vmem:[%s97] ss:$4 sm:$0xff] %v74
    %118 = vst [vmem:[%s99] ss:$4 sm:$0xff] %v69
    %119 = vst [vmem:[%s101] ss:$4 sm:$0xff] %v71
    %120 = vst [vmem:[%s103] ss:$4 sm:$0xff] %v73
    %121 = vst [vmem:[%s105] ss:$4 sm:$0xff] %v75
    %v122 = vld.sshfl [vmem:[#allocation1] sm:$0xff pattern:$0x73625140]
    %v123 = vld.sshfl [vmem:[#allocation1 + $0x8] sm:$0xff pattern:$0x73625140]
    %v124 = vld.sshfl [vmem:[#allocation1 + $0x10] sm:$0xff pattern:$0x73625140]
    %v125 = vld.sshfl [vmem:[#allocation1 + $0x18] sm:$0xff pattern:$0x73625140]
    %v126 = vld.sshfl [vmem:[#allocation1 + $0x20] sm:$0xff pattern:$0x73625140]
    %v127 = vld.sshfl [vmem:[#allocation1 + $0x28] sm:$0xff pattern:$0x73625140]
    %v128 = vld.sshfl [vmem:[#allocation1 + $0x30] sm:$0xff pattern:$0x73625140]
    %v143 = vpack.c.bf16 %v122, %v107
    %v144 = vpack.c.bf16 %v123, %v108
    %v145 = vpack.c.bf16 %v124, %v109
    %v146 = vpack.c.bf16 %v125, %v110
    %v147 = vpack.c.bf16 %v126, %v111
    %v148 = vpack.c.bf16 %v127, %v112
    %v149 = vpack.c.bf16 %v128, %v113
    %v150 = vld [vmem:[#allocation5] sm:$0xf]
    %v151 = vld [vmem:[#allocation5 + $0x4] sm:$0xf]
    %v152 = vld [vmem:[#allocation5 + $0x8] sm:$0xf]
    %v153 = vld [vmem:[#allocation5 + $0xc] sm:$0xf]
    %v154 = vld [vmem:[#allocation5 + $0x10] sm:$0xf]
    %v155 = vld [vmem:[#allocation5 + $0x14] sm:$0xf]
    %v156 = vld [vmem:[#allocation5 + $0x18] sm:$0xf]
    %v157 = vld [vmem:[#allocation5 + $0x1c] sm:$0xf]
    %v158 = vld [vmem:[#allocation5 + $0x20] sm:$0xf]
    %v159 = vld [vmem:[#allocation5 + $0x24] sm:$0xf]
    %v160 = vld [vmem:[#allocation5 + $0x28] sm:$0xf]
    %v161 = vld [vmem:[#allocation5 + $0x2c] sm:$0xf]
    %v162 = vld [vmem:[#allocation5 + $0x30] sm:$0xf]
    %v163 = vld [vmem:[#allocation5 + $0x34] sm:$0xf]
    %v164 = vld [vmem:[#allocation5 + $0x38] sm:$0xf]
    %v165 = vld [vmem:[#allocation5 + $0x3c] sm:$0xf]
    %v166 = vld [vmem:[#allocation5 + $0x40] sm:$0xf]
    %v167 = vld [vmem:[#allocation5 + $0x44] sm:$0xf]
    %v168 = vld [vmem:[#allocation5 + $0x48] sm:$0xf]
    %v169 = vld [vmem:[#allocation5 + $0x4c] sm:$0xf]
    %v170 = vld [vmem:[#allocation5 + $0x50] sm:$0xf]
    %v171 = vld [vmem:[#allocation5 + $0x54] sm:$0xf]
    %v172 = vld [vmem:[#allocation5 + $0x58] sm:$0xf]
    %v173 = vld [vmem:[#allocation5 + $0x5c] sm:$0xf]
    %v174 = vld [vmem:[#allocation5 + $0x60] sm:$0xf]
    %v175 = vld [vmem:[#allocation5 + $0x64] sm:$0xf]
    %v176 = vld [vmem:[#allocation5 + $0x68] sm:$0xf]
    %v177 = vld [vmem:[#allocation5 + $0x6c] sm:$0xf]
    %v178 = vld [vmem:[#allocation5 + $0x70] sm:$0xf]
    %v179 = vld [vmem:[#allocation5 + $0x74] sm:$0xf]
    %v180 = vld [vmem:[#allocation5 + $0x78] sm:$0xf]
    %v181 = vld [vmem:[#allocation5 + $0x7c] sm:$0xf]
    %v182 = vld [vmem:[#allocation5 + $0x80] sm:$0xf]
    %v183 = vld [vmem:[#allocation5 + $0x84] sm:$0xf]
    %v184 = vld [vmem:[#allocation5 + $0x88] sm:$0xf]
    %v185 = vld [vmem:[#allocation5 + $0x8c] sm:$0xf]
    %v186 = vld [vmem:[#allocation5 + $0x90] sm:$0xf]
    %v187 = vld [vmem:[#allocation5 + $0x94] sm:$0xf]
    %v188 = vld [vmem:[#allocation5 + $0x98] sm:$0xf]
    %v189 = vld [vmem:[#allocation5 + $0x9c] sm:$0xf]
    %v190 = vld [vmem:[#allocation5 + $0xa0] sm:$0xf]
    %v191 = vld [vmem:[#allocation5 + $0xa4] sm:$0xf]
    %v192 = vld [vmem:[#allocation5 + $0xa8] sm:$0xf]
    %v193 = vld [vmem:[#allocation5 + $0xac] sm:$0xf]
    %v194 = vld [vmem:[#allocation5 + $0xb0] sm:$0xf]
    %v195 = vld [vmem:[#allocation5 + $0xb4] sm:$0xf]
    %v196 = vld [vmem:[#allocation5 + $0xb8] sm:$0xf]
    %v197 = vld [vmem:[#allocation5 + $0xbc] sm:$0xf]
    %v198 = vld [vmem:[#allocation5 + $0xc0] sm:$0xf]
    %v199 = vld [vmem:[#allocation5 + $0xc4] sm:$0xf]
    %v200 = vld [vmem:[#allocation5 + $0xc8] sm:$0xf]
    %v201 = vld [vmem:[#allocation5 + $0xcc] sm:$0xf]
    %v202 = vld [vmem:[#allocation5 + $0xd0] sm:$0xf]
    %v203 = vld [vmem:[#allocation5 + $0xd4] sm:$0xf]
    %v204 = vld [vmem:[#allocation5 + $0xd8] sm:$0xf]
    %v205 = vld [vmem:[#allocation5 + $0xdc] sm:$0xf]
    %v206 = vld [vmem:[#allocation5 + $0xe0] sm:$0xf]
    %v207 = vld [vmem:[#allocation5 + $0xe4] sm:$0xf]
    %v208 = vld [vmem:[#allocation5 + $0xe8] sm:$0xf]
    %v209 = vld [vmem:[#allocation5 + $0xec] sm:$0xf]
    %v210 = vld [vmem:[#allocation5 + $0xf0] sm:$0xf]
    %v211 = vld [vmem:[#allocation5 + $0xf4] sm:$0xf]
    %v212 = vld [vmem:[#allocation5 + $0xf8] sm:$0xf]
    %v213 = vld [vmem:[#allocation5 + $0xfc] sm:$0xf]
    %v214 = vld [vmem:[#allocation5 + $0x100] sm:$0xf]
    %v215 = vld [vmem:[#allocation5 + $0x104] sm:$0xf]
    %v216 = vld [vmem:[#allocation5 + $0x108] sm:$0xf]
    %v217 = vld [vmem:[#allocation5 + $0x10c] sm:$0xf]
    %v218 = vld [vmem:[#allocation5 + $0x110] sm:$0xf]
    %v219 = vld [vmem:[#allocation5 + $0x114] sm:$0xf]
    %v220 = vld [vmem:[#allocation5 + $0x118] sm:$0xf]
    %v221 = vld [vmem:[#allocation5 + $0x11c] sm:$0xf]
    %v222 = vld [vmem:[#allocation5 + $0x120] sm:$0xf]
    %v223 = vld [vmem:[#allocation5 + $0x124] sm:$0xf]
    %v224 = vld [vmem:[#allocation5 + $0x128] sm:$0xf]
    %v225 = vld [vmem:[#allocation5 + $0x12c] sm:$0xf]
    %v226 = vld [vmem:[#allocation5 + $0x130] sm:$0xf]
    %v227 = vld [vmem:[#allocation5 + $0x134] sm:$0xf]
    %v228 = vld [vmem:[#allocation5 + $0x138] sm:$0xf]
    %v229 = vld [vmem:[#allocation5 + $0x13c] sm:$0xf]
    %v230 = vld [vmem:[#allocation5 + $0x140] sm:$0xf]
    %v231 = vld [vmem:[#allocation5 + $0x144] sm:$0xf]
    %v232 = vld [vmem:[#allocation5 + $0x148] sm:$0xf]
    %v233 = vld [vmem:[#allocation5 + $0x14c] sm:$0xf]
    %v234 = vld [vmem:[#allocation5 + $0x150] sm:$0xf]
    %v235 = vld [vmem:[#allocation5 + $0x154] sm:$0xf]
    %v236 = vld [vmem:[#allocation5 + $0x158] sm:$0xf]
    %v237 = vld [vmem:[#allocation5 + $0x15c] sm:$0xf]
    %v238 = vld [vmem:[#allocation5 + $0x160] sm:$0xf]
    %v239 = vld [vmem:[#allocation5 + $0x164] sm:$0xf]
    %v240 = vld [vmem:[#allocation5 + $0x168] sm:$0xf]
    %v241 = vld [vmem:[#allocation5 + $0x16c] sm:$0xf]
    %v242 = vld [vmem:[#allocation5 + $0x170] sm:$0xf]
    %v243 = vld [vmem:[#allocation5 + $0x174] sm:$0xf]
    %v244 = vld [vmem:[#allocation5 + $0x178] sm:$0xf]
    %v245 = vld [vmem:[#allocation5 + $0x17c] sm:$0xf]
    %v246 = vld [vmem:[#allocation5 + $0x180] sm:$0xf]
    %v247 = vld [vmem:[#allocation5 + $0x184] sm:$0xf]
    %v248 = vld [vmem:[%s2] sm:$0x1]
    %v250 = vperm.slane %v248, 0
    %v350 = vunpack.c.l.b16 %v150
    %v351 = vunpack.c.l.b16 %v151
    %v352 = vunpack.c.l.b16 %v152
    %v353 = vunpack.c.l.b16 %v153
    %v354 = vunpack.c.l.b16 %v154
    %v355 = vunpack.c.l.b16 %v155
    %v356 = vunpack.c.l.b16 %v156
    %v357 = vunpack.c.l.b16 %v157
    %v358 = vunpack.c.l.b16 %v158
    %v359 = vunpack.c.l.b16 %v159
    %v360 = vunpack.c.l.b16 %v160
    %v361 = vunpack.c.l.b16 %v161
    %v362 = vunpack.c.l.b16 %v162
    %v363 = vunpack.c.l.b16 %v163
    %v364 = vunpack.c.l.b16 %v164
    %v365 = vunpack.c.l.b16 %v165
    %v366 = vunpack.c.l.b16 %v166
    %v367 = vunpack.c.l.b16 %v167
    %v368 = vunpack.c.l.b16 %v168
    %v369 = vunpack.c.l.b16 %v169
    %v370 = vunpack.c.l.b16 %v170
    %v371 = vunpack.c.l.b16 %v171
    %v372 = vunpack.c.l.b16 %v172
    %v373 = vunpack.c.l.b16 %v173
    %v374 = vunpack.c.l.b16 %v174
    %v375 = vunpack.c.l.b16 %v175
    %v376 = vunpack.c.l.b16 %v176
    %v377 = vunpack.c.l.b16 %v177
    %v378 = vunpack.c.l.b16 %v178
    %v379 = vunpack.c.l.b16 %v179
    %v380 = vunpack.c.l.b16 %v180
    %v381 = vunpack.c.l.b16 %v181
    %v382 = vunpack.c.l.b16 %v182
    %v383 = vunpack.c.l.b16 %v183
    %v384 = vunpack.c.l.b16 %v184
    %v385 = vunpack.c.l.b16 %v185
    %v386 = vunpack.c.l.b16 %v186
    %v387 = vunpack.c.l.b16 %v187
    %v388 = vunpack.c.l.b16 %v188
    %v389 = vunpack.c.l.b16 %v189
    %v390 = vunpack.c.l.b16 %v190
    %v391 = vunpack.c.l.b16 %v191
    %v392 = vunpack.c.l.b16 %v192
    %v393 = vunpack.c.l.b16 %v193
    %v394 = vunpack.c.l.b16 %v194
    %v395 = vunpack.c.l.b16 %v195
    %v396 = vunpack.c.l.b16 %v196
    %v397 = vunpack.c.l.b16 %v197
    %v398 = vunpack.c.l.b16 %v198
    %v399 = vunpack.c.l.b16 %v199
    %v400 = vunpack.c.l.b16 %v200
    %v401 = vunpack.c.l.b16 %v201
    %v402 = vunpack.c.l.b16 %v202
    %v403 = vunpack.c.l.b16 %v203
    %v404 = vunpack.c.l.b16 %v204
    %v405 = vunpack.c.l.b16 %v205
    %v406 = vunpack.c.l.b16 %v206
    %v407 = vunpack.c.l.b16 %v207
    %v408 = vunpack.c.l.b16 %v208
    %v409 = vunpack.c.l.b16 %v209
    %v410 = vunpack.c.l.b16 %v210
    %v411 = vunpack.c.l.b16 %v211
    %v412 = vunpack.c.l.b16 %v212
    %v413 = vunpack.c.l.b16 %v213
    %v414 = vunpack.c.l.b16 %v214
    %v415 = vunpack.c.l.b16 %v215
    %v416 = vunpack.c.l.b16 %v216
    %v417 = vunpack.c.l.b16 %v217
    %v418 = vunpack.c.l.b16 %v218
    %v419 = vunpack.c.l.b16 %v219
    %v420 = vunpack.c.l.b16 %v220
    %v421 = vunpack.c.l.b16 %v221
    %v422 = vunpack.c.l.b16 %v222
    %v423 = vunpack.c.l.b16 %v223
    %v424 = vunpack.c.l.b16 %v224
    %v425 = vunpack.c.l.b16 %v225
    %v426 = vunpack.c.l.b16 %v226
    %v427 = vunpack.c.l.b16 %v227
    %v428 = vunpack.c.l.b16 %v228
    %v429 = vunpack.c.l.b16 %v229
    %v430 = vunpack.c.l.b16 %v230
    %v431 = vunpack.c.l.b16 %v231
    %v432 = vunpack.c.l.b16 %v232
    %v433 = vunpack.c.l.b16 %v233
    %v434 = vunpack.c.l.b16 %v234
    %v435 = vunpack.c.l.b16 %v235
    %v436 = vunpack.c.l.b16 %v236
    %v437 = vunpack.c.l.b16 %v237
    %v438 = vunpack.c.l.b16 %v238
    %v439 = vunpack.c.l.b16 %v239
    %v440 = vunpack.c.l.b16 %v240
    %v441 = vunpack.c.l.b16 %v241
    %v442 = vunpack.c.l.b16 %v242
    %v443 = vunpack.c.l.b16 %v243
    %v444 = vunpack.c.l.b16 %v244
    %v445 = vunpack.c.l.b16 %v245
    %v446 = vunpack.c.l.b16 %v246
    %v447 = vunpack.c.l.b16 %v247
    %v448 = vpack.c.b16 %v351, %v350
    %v449 = vpack.c.b16 %v353, %v352
    %v450 = vpack.c.b16 %v355, %v354
    %v451 = vpack.c.b16 %v357, %v356
    %v452 = vpack.c.b16 %v359, %v358
    %v453 = vpack.c.b16 %v361, %v360
    %v454 = vpack.c.b16 %v363, %v362
    %v455 = vpack.c.b16 %v365, %v364
    %v456 = vpack.c.b16 %v367, %v366
    %v457 = vpack.c.b16 %v369, %v368
    %v458 = vpack.c.b16 %v371, %v370
    %v459 = vpack.c.b16 %v373, %v372
    %v460 = vpack.c.b16 %v375, %v374
    %v461 = vpack.c.b16 %v377, %v376
    %v462 = vpack.c.b16 %v379, %v378
    %v463 = vpack.c.b16 %v381, %v380
    %v464 = vpack.c.b16 %v383, %v382
    %v465 = vpack.c.b16 %v385, %v384
    %v466 = vpack.c.b16 %v387, %v386
    %v467 = vpack.c.b16 %v389, %v388
    %v468 = vpack.c.b16 %v391, %v390
    %v469 = vpack.c.b16 %v393, %v392
    %v470 = vpack.c.b16 %v395, %v394
    %v471 = vpack.c.b16 %v397, %v396
    %v472 = vpack.c.b16 %v399, %v398
    %v473 = vpack.c.b16 %v401, %v400
    %v474 = vpack.c.b16 %v403, %v402
    %v475 = vpack.c.b16 %v405, %v404
    %v476 = vpack.c.b16 %v407, %v406
    %v477 = vpack.c.b16 %v409, %v408
    %v478 = vpack.c.b16 %v411, %v410
    %v479 = vpack.c.b16 %v413, %v412
    %v480 = vpack.c.b16 %v415, %v414
    %v481 = vpack.c.b16 %v417, %v416
    %v482 = vpack.c.b16 %v419, %v418
    %v483 = vpack.c.b16 %v421, %v420
    %v484 = vpack.c.b16 %v423, %v422
    %v485 = vpack.c.b16 %v425, %v424
    %v486 = vpack.c.b16 %v427, %v426
    %v487 = vpack.c.b16 %v429, %v428
    %v488 = vpack.c.b16 %v431, %v430
    %v489 = vpack.c.b16 %v433, %v432
    %v490 = vpack.c.b16 %v435, %v434
    %v491 = vpack.c.b16 %v437, %v436
    %v492 = vpack.c.b16 %v439, %v438
    %v493 = vpack.c.b16 %v441, %v440
    %v494 = vpack.c.b16 %v443, %v442
    %v495 = vpack.c.b16 %v445, %v444
    %v496 = vpack.c.b16 %v447, %v446
    %vm546 = vcmask 130048
    %v548 = vsel %vm546, %v149, 0
    %550 = vmatpush.bf16.msra.mxu0 %v455
    %551 = vmatpush.bf16.msra.mxu0 %v454
    %552 = vmatpush.bf16.msra.mxu0 %v453
    %553 = vmatpush.bf16.msra.mxu0 %v452
    %554 = vmatpush.bf16.msra.mxu0 %v451
    %555 = vmatpush.bf16.msra.mxu0 %v450
    %556 = vmatpush.bf16.msra.mxu0 %v449
    %557 = vmatpush.bf16.msra.mxu0 %v448
    %558 = vmatmul.bf16.gmra.mxu0 %v143
    %v559 = vpop.f32.mrf.mxu0
    %v560 = vadd.f32 %v250, %v559
    %v561 = vpop.f32.mrf.mxu0
    %v562 = vadd.f32 %v250, %v561
    %563 = vdwg.mxu0
    %564 = vmatpush.bf16.msra.mxu0 %v463
    %565 = vmatpush.bf16.msra.mxu0 %v462
    %566 = vmatpush.bf16.msra.mxu0 %v461
    %567 = vmatpush.bf16.msra.mxu0 %v460
    %568 = vmatpush.bf16.msra.mxu0 %v459
    %569 = vmatpush.bf16.msra.mxu0 %v458
    %570 = vmatpush.bf16.msra.mxu0 %v457
    %571 = vmatpush.bf16.msra.mxu0 %v456
    %572 = vmatmul.bf16.gmra.mxu0 %v144
    %v573 = vpop.f32.mrf.mxu0
    %v574 = vadd.f32 %v560, %v573
    %v575 = vpop.f32.mrf.mxu0
    %v576 = vadd.f32 %v562, %v575
    %577 = vdwg.mxu0
    %578 = vmatpush.bf16.msra.mxu0 %v471
    %579 = vmatpush.bf16.msra.mxu0 %v470
    %580 = vmatpush.bf16.msra.mxu0 %v469
    %581 = vmatpush.bf16.msra.mxu0 %v468
    %582 = vmatpush.bf16.msra.mxu0 %v467
    %583 = vmatpush.bf16.msra.mxu0 %v466
    %584 = vmatpush.bf16.msra.mxu0 %v465
    %585 = vmatpush.bf16.msra.mxu0 %v464
    %586 = vmatmul.bf16.gmra.mxu0 %v145
    %v587 = vpop.f32.mrf.mxu0
    %v588 = vadd.f32 %v574, %v587
    %v589 = vpop.f32.mrf.mxu0
    %v590 = vadd.f32 %v576, %v589
    %591 = vdwg.mxu0
    %592 = vmatpush.bf16.msra.mxu0 %v479
    %593 = vmatpush.bf16.msra.mxu0 %v478
    %594 = vmatpush.bf16.msra.mxu0 %v477
    %595 = vmatpush.bf16.msra.mxu0 %v476
    %596 = vmatpush.bf16.msra.mxu0 %v475
    %597 = vmatpush.bf16.msra.mxu0 %v474
    %598 = vmatpush.bf16.msra.mxu0 %v473
    %599 = vmatpush.bf16.msra.mxu0 %v472
    %600 = vmatmul.bf16.gmra.mxu0 %v146
    %v601 = vpop.f32.mrf.mxu0
    %v602 = vadd.f32 %v588, %v601
    %v603 = vpop.f32.mrf.mxu0
    %v604 = vadd.f32 %v590, %v603
    %605 = vdwg.mxu0
    %606 = vmatpush.bf16.msra.mxu0 %v487
    %607 = vmatpush.bf16.msra.mxu0 %v486
    %608 = vmatpush.bf16.msra.mxu0 %v485
    %609 = vmatpush.bf16.msra.mxu0 %v484
    %610 = vmatpush.bf16.msra.mxu0 %v483
    %611 = vmatpush.bf16.msra.mxu0 %v482
    %612 = vmatpush.bf16.msra.mxu0 %v481
    %613 = vmatpush.bf16.msra.mxu0 %v480
    %614 = vmatmul.bf16.gmra.mxu0 %v147
    %v615 = vpop.f32.mrf.mxu0
    %v616 = vadd.f32 %v602, %v615
    %v617 = vpop.f32.mrf.mxu0
    %v618 = vadd.f32 %v604, %v617
    %619 = vdwg.mxu0
    %620 = vmatpush.bf16.msra.mxu0 %v495
    %621 = vmatpush.bf16.msra.mxu0 %v494
    %622 = vmatpush.bf16.msra.mxu0 %v493
    %623 = vmatpush.bf16.msra.mxu0 %v492
    %624 = vmatpush.bf16.msra.mxu0 %v491
    %625 = vmatpush.bf16.msra.mxu0 %v490
    %626 = vmatpush.bf16.msra.mxu0 %v489
    %627 = vmatpush.bf16.msra.mxu0 %v488
    %628 = vmatmul.bf16.gmra.mxu0 %v148
    %v629 = vpop.f32.mrf.mxu0
    %v630 = vadd.f32 %v616, %v629
    %v631 = vpop.f32.mrf.mxu0
    %v632 = vadd.f32 %v618, %v631
    %633 = vdwg.mxu0
    %634 = vmatpush.bf16.msra.mxu0 0
    %635 = vmatpush.bf16.msra.mxu0 0
    %636 = vmatpush.bf16.msra.mxu0 0
    %637 = vmatpush.bf16.msra.mxu0 0
    %638 = vmatpush.bf16.msra.mxu0 0
    %639 = vmatpush.bf16.msra.mxu0 0
    %640 = vmatpush.bf16.msra.mxu0 0
    %641 = vmatpush.bf16.msra.mxu0 %v496
    %642 = vmatmul.bf16.gmra.mxu0 %v548
    %v643 = vpop.f32.mrf.mxu0
    %v644 = vadd.f32 %v630, %v643
    %v645 = vpop.f32.mrf.mxu0
    %v646 = vadd.f32 %v632, %v645
    %647 = vdwg.mxu0
    %v648 = vmax.f32 %v644, 0.0
    %v649 = vmax.f32 %v646, 0.0
    %v650 = vpack.c.bf16 %v649, %v648
    %v651 = vld [vmem:[%s3] sm:$0xf]
    %v652 = vld [vmem:[%s3 + $0x4] sm:$0xf]
    %v653 = vld [vmem:[%s3 + $0x8] sm:$0xf]
    %v654 = vld [vmem:[%s3 + $0xc] sm:$0xf]
    %v655 = vld [vmem:[%s3 + $0x10] sm:$0xf]
    %v656 = vld [vmem:[%s3 + $0x14] sm:$0xf]
    %v657 = vld [vmem:[%s3 + $0x18] sm:$0xf]
    %v658 = vld [vmem:[%s3 + $0x1c] sm:$0xf]
    %v659 = vld [vmem:[%s3 + $0x20] sm:$0xf]
    %v660 = vld [vmem:[%s3 + $0x24] sm:$0xf]
    %v661 = vld [vmem:[%s3 + $0x28] sm:$0xf]
    %v662 = vld [vmem:[%s3 + $0x2c] sm:$0xf]
    %v663 = vld [vmem:[%s3 + $0x30] sm:$0xf]
    %v664 = vld [vmem:[%s3 + $0x34] sm:$0xf]
    %v665 = vld [vmem:[%s3 + $0x38] sm:$0xf]
    %v666 = vld [vmem:[%s3 + $0x3c] sm:$0xf]
    %v667 = vld [vmem:[%s4] sm:$0x1]
    %v669 = vperm.slane %v667, 0
    %v687 = vunpack.c.l.b16 %v651
    %v688 = vunpack.c.l.b16 %v652
    %v689 = vunpack.c.l.b16 %v653
    %v690 = vunpack.c.l.b16 %v654
    %v691 = vunpack.c.l.b16 %v655
    %v692 = vunpack.c.l.b16 %v656
    %v693 = vunpack.c.l.b16 %v657
    %v694 = vunpack.c.l.b16 %v658
    %v695 = vunpack.c.l.b16 %v659
    %v696 = vunpack.c.l.b16 %v660
    %v697 = vunpack.c.l.b16 %v661
    %v698 = vunpack.c.l.b16 %v662
    %v699 = vunpack.c.l.b16 %v663
    %v700 = vunpack.c.l.b16 %v664
    %v701 = vunpack.c.l.b16 %v665
    %v702 = vunpack.c.l.b16 %v666
    %v703 = vpack.c.b16 %v688, %v687
    %v704 = vpack.c.b16 %v690, %v689
    %v705 = vpack.c.b16 %v692, %v691
    %v706 = vpack.c.b16 %v694, %v693
    %v707 = vpack.c.b16 %v696, %v695
    %v708 = vpack.c.b16 %v698, %v697
    %v709 = vpack.c.b16 %v700, %v699
    %v710 = vpack.c.b16 %v702, %v701
    %719 = vmatpush.bf16.msra.mxu0 %v710
    %720 = vmatpush.bf16.msra.mxu0 %v709
    %721 = vmatpush.bf16.msra.mxu0 %v708
    %722 = vmatpush.bf16.msra.mxu0 %v707
    %723 = vmatpush.bf16.msra.mxu0 %v706
    %724 = vmatpush.bf16.msra.mxu0 %v705
    %725 = vmatpush.bf16.msra.mxu0 %v704
    %726 = vmatpush.bf16.msra.mxu0 %v703
    %727 = vmatmul.bf16.gmra.mxu0 %v650
    %v728 = vpop.f32.mrf.mxu0
    %v729 = vadd.f32 %v669, %v728
    %v730 = vpop.f32.mrf.mxu0
    %v731 = vadd.f32 %v669, %v730
    %732 = vdwg.mxu0
    %v733 = vmax.f32 %v729, 0.0
    %v734 = vmax.f32 %v731, 0.0
    %v735 = vpack.c.bf16 %v734, %v733
    %v736 = vld [vmem:[%s5] sm:$0xf]
    %v737 = vld [vmem:[%s5 + $0x4] sm:$0xf]
    %v738 = vld [vmem:[%s5 + $0x8] sm:$0xf]
    %v739 = vld [vmem:[%s5 + $0xc] sm:$0xf]
    %v740 = vld [vmem:[%s5 + $0x10] sm:$0xf]
    %v741 = vld [vmem:[%s5 + $0x14] sm:$0xf]
    %v742 = vld [vmem:[%s5 + $0x18] sm:$0xf]
    %v743 = vld [vmem:[%s5 + $0x1c] sm:$0xf]
    %v744 = vld [vmem:[%s5 + $0x20] sm:$0xf]
    %v745 = vld [vmem:[%s5 + $0x24] sm:$0xf]
    %v746 = vld [vmem:[%s5 + $0x28] sm:$0xf]
    %v747 = vld [vmem:[%s5 + $0x2c] sm:$0xf]
    %v748 = vld [vmem:[%s5 + $0x30] sm:$0xf]
    %v749 = vld [vmem:[%s5 + $0x34] sm:$0xf]
    %v750 = vld [vmem:[%s5 + $0x38] sm:$0xf]
    %v751 = vld [vmem:[%s5 + $0x3c] sm:$0xf]
    %v752 = vld [vmem:[%s6] sm:$0x1]
    %v754 = vperm.slane %v752, 0
    %v772 = vunpack.c.l.b16 %v736
    %v773 = vunpack.c.l.b16 %v737
    %v774 = vunpack.c.l.b16 %v738
    %v775 = vunpack.c.l.b16 %v739
    %v776 = vunpack.c.l.b16 %v740
    %v777 = vunpack.c.l.b16 %v741
    %v778 = vunpack.c.l.b16 %v742
    %v779 = vunpack.c.l.b16 %v743
    %v780 = vunpack.c.l.b16 %v744
    %v781 = vunpack.c.l.b16 %v745
    %v782 = vunpack.c.l.b16 %v746
    %v783 = vunpack.c.l.b16 %v747
    %v784 = vunpack.c.l.b16 %v748
    %v785 = vunpack.c.l.b16 %v749
    %v786 = vunpack.c.l.b16 %v750
    %v787 = vunpack.c.l.b16 %v751
    %v788 = vpack.c.b16 %v773, %v772
    %v789 = vpack.c.b16 %v775, %v774
    %v790 = vpack.c.b16 %v777, %v776
    %v791 = vpack.c.b16 %v779, %v778
    %v792 = vpack.c.b16 %v781, %v780
    %v793 = vpack.c.b16 %v783, %v782
    %v794 = vpack.c.b16 %v785, %v784
    %v795 = vpack.c.b16 %v787, %v786
    %804 = vmatpush.bf16.msra.mxu0 %v795
    %805 = vmatpush.bf16.msra.mxu0 %v794
    %806 = vmatpush.bf16.msra.mxu0 %v793
    %807 = vmatpush.bf16.msra.mxu0 %v792
    %808 = vmatpush.bf16.msra.mxu0 %v791
    %809 = vmatpush.bf16.msra.mxu0 %v790
    %810 = vmatpush.bf16.msra.mxu0 %v789
    %811 = vmatpush.bf16.msra.mxu0 %v788
    %812 = vmatmul.bf16.gmra.mxu0 %v735
    %v813 = vpop.f32.mrf.mxu0
    %v814 = vadd.f32 %v754, %v813
    %v815 = vpop.f32.mrf.mxu0
    %v816 = vadd.f32 %v754, %v815
    %817 = vdwg.mxu0
    %vm818 = vcmask 80896
    %819 = vst.msk [vmem:[#allocation7] sm:$0xff] %vm818, %v814
    %820 = vst.msk [vmem:[#allocation7 + $0x8] sm:$0xff] %vm818, %v816
    // Predicated region
    $region38: #{tpu_custom_call.1} parent=1 // pred_check
      _
    $region39: #{tpu_custom_call.1} parent=1 // pred_check_branch
      %822 = sbr.rel (0) target = $region41
    $region40: #{tpu_custom_call.1} parent=1 // pred_region
      %824 = vsyncadd [#allocation4], 224
      %s825 = sshll.u32 [#allocation7], 4
      %s826 = int_to_ptr.vmem [resolvable:$true] %s825
      %s827 = sshll.u32 %s7, 4
      %s828 = int_to_ptr.hbm [resolvable:$true] %s827
      %833 = dma.vmem_to_hbm [thread:$0]  %s826, 32, %s828, [#allocation4], 32, 32, 2
    $region41: #{tpu_custom_call.1} parent=1 // pred_fallthru
      _
    // Predicated region
    $region42: #{tpu_custom_call.1} parent=1 // pred_check
      _
    $region43: #{tpu_custom_call.1} parent=1 // pred_check_branch
      %835 = sbr.rel (0) target = $region45
    $region44: #{tpu_custom_call.1} parent=1 // pred_region
      %837 = dma.done [#allocation4], 256
    $region45: #{tpu_custom_call.1} parent=1 // pred_fallthru
      _
    %838 = vsyncpa [#allocation3], 1
    %839 = vsyncpa [#allocation6], 1
    %840 = vsyncpa [#allocation4], 1

</llo_original>
